<compile_context>
chip_gen: v6e
topology: v6e:2x2x1
jax: 0.10.0
libtpu: 0.0.40
codegen_flags: <defaults>
</compile_context>

<pallas_src>
import functools

import jax
import jax.numpy as jnp
from jax import lax
from jax.experimental import pallas as pl
from jax.experimental.pallas import tpu as pltpu

_NEG_INF = -1.0e30  # large-negative mask value (avoids inf-inf hazards)


def _round_up(x, m):
    return ((x + m - 1) // m) * m


def _tpu_limits():
    """Generation-aware tile caps / VMEM budget. Conservative (v7x-like) fallback."""
    try:
        info = pltpu.get_tpu_info()
        vmem_bytes = int(getattr(info, "vmem_capacity_bytes", 64 * 1024 * 1024))
    except Exception:  # no TPU info available -> be conservative
        vmem_bytes = 64 * 1024 * 1024
    if vmem_bytes >= 100 * 1024 * 1024:
        # v5e / v6e: 128 MiB physical VMEM, single TensorCore per chip.
        return dict(max_block_c=1024, max_block_b=256,
                    vmem_limit=96 * 1024 * 1024, split_batch_for_cores=False)
    # v7x (or unknown): 64 MiB VMEM, 2 TensorCores per chip.
    return dict(max_block_c=512, max_block_b=128,
                vmem_limit=48 * 1024 * 1024, split_batch_for_cores=True)


def _softmax_loss_kernel(emb_ref, w_ref, lab_ref, *rest,
                         batch, block_b, block_c, mask_padding, mask_rows):
    # emb_ref: (tB, D)   w_ref: (D, tC)   lab_ref: (tB, 1) int32
    # [bias_ref: (1, tC) f32 additive class-padding bias, only if mask_padding]
    # loss_ref: (1, 1) f32 in SMEM (partial sum of per-example losses of this B tile)
    # scratch m_sc/l_sc/t_sc: (tB, 1) f32  running max / running sum / target logit
    if mask_padding:
        bias_ref, loss_ref, m_sc, l_sc, t_sc = rest
    else:
        loss_ref, m_sc, l_sc, t_sc = rest
        bias_ref = None

    b = pl.program_id(0)
    c = pl.program_id(1)

    @pl.when(c == 0)
    def _():
        m_sc[...] = jnp.full_like(m_sc, _NEG_INF)
        l_sc[...] = jnp.zeros_like(l_sc)
        t_sc[...] = jnp.zeros_like(t_sc)

    # MXU matmul in the streamed storage dtype (bf16-friendly), f32 accumulation.
    logits = jnp.dot(emb_ref[...], w_ref[...],
                     preferred_element_type=jnp.float32)            # (tB, tC)

    if mask_padding:
        # Additive bias row: 0 for real classes, -1e30 for padded columns.
        logits = logits + bias_ref[...]

    # Online (numerically stable) log-sum-exp update across class tiles.
    m_prev = m_sc[...]
    m_new = jnp.maximum(m_prev, jnp.max(logits, axis=-1, keepdims=True))
    alpha = jnp.exp(m_prev - m_new)
    l_sc[...] = alpha * l_sc[...] + jnp.sum(jnp.exp(logits - m_new),
                                            axis=-1, keepdims=True)
    m_sc[...] = m_new

    # Accumulate the target-class logit (select fuses into the reduction; padded
    # columns can never match a real label since labels < num_classes).
    col = c * block_c + lax.broadcasted_iota(jnp.int32, logits.shape, 1)
    labels = lab_ref[...]                                            # (tB, 1)
    t_sc[...] += jnp.sum(jnp.where(col == labels, logits, 0.0),
                         axis=-1, keepdims=True)

    @pl.when(c == pl.num_programs(1) - 1)
    def _():
        per_row = (m_sc[...] + jnp.log(l_sc[...])) - t_sc[...]       # (tB, 1)
        if mask_rows:
            row = b * block_b + lax.broadcasted_iota(jnp.int32, per_row.shape, 0)
            per_row = jnp.where(row < batch, per_row, 0.0)
        loss_ref[0, 0] = jnp.sum(per_row)


def my_softmax_loss(embedding, W, labels, *, matmul_dtype=None,
                    block_b=None, block_c=None):
    """embedding: (B, D), W: (D, C), labels: (B,) int -> scalar f32 mean CE loss.

    matmul_dtype: optional storage dtype for the matmul operands (e.g. jnp.bfloat16)
    to cut HBM traffic / raise MXU rate; accumulation and LSE math stay f32.
    """
    B, D = embedding.shape
    D2, C = W.shape
    assert D == D2 and labels.shape[0] == B

    lim = _tpu_limits()

    if matmul_dtype is not None:
        embedding = embedding.astype(matmul_dtype)
        W = W.astype(matmul_dtype)
    itemsize = jnp.dtype(embedding.dtype).itemsize
    sublane = {4: 8, 2: 16, 1: 32}.get(itemsize, 8)

    # ---- batch tile (sublane-aligned; split for v7x's two TensorCores) ----------
    if block_b is None:
        b_req = _round_up(B, sublane)
        block_b = min(b_req, lim["max_block_b"])
        if (lim["split_batch_for_cores"] and b_req <= lim["max_block_b"]
                and b_req >= 2 * sublane):
            block_b = _round_up((b_req + 1) // 2, sublane)   # >= 2 batch tiles
    b_pad = _round_up(B, block_b)

    # ---- class tile (lane-dense; pad C up to a multiple of block_c) -------------
    if block_c is None:
        need = _round_up(C, 128)
        block_c = 128
        for cand in (1024, 512, 256, 128):
            if cand <= lim["max_block_c"] and cand <= max(need, 128):
                block_c = cand
                break
        # keep W tile (+ pipelining buffers) well inside the VMEM budget
        w_bufs = 3 if D >= 512 else 2
        while block_c > 128 and (w_bufs * D * block_c * itemsize
                                 + 2 * block_b * D * itemsize) > lim["vmem_limit"] // 2:
            block_c //= 2
    c_pad = _round_up(C, block_c)

    # ---- padded operands ---------------------------------------------------------
    emb_p = embedding if b_pad == B else jnp.pad(embedding,
                                                 ((0, b_pad - B), (0, 0)))
    w_p = W if c_pad == C else jnp.pad(W, ((0, 0), (0, c_pad - C)))
    lab_p = labels.astype(jnp.int32).reshape(B, 1)
    if b_pad != B:
        lab_p = jnp.pad(lab_p, ((0, b_pad - B), (0, 0)))

    n_b = b_pad // block_b
    n_c = c_pad // block_c
    mask_padding = (c_pad != C)
    mask_rows = (b_pad != B)

    # ---- specs -------------------------------------------------------------------
    if D >= 512:
        w_spec = pl.BlockSpec((D, block_c), lambda b, c: (0, c),
                              pipeline_mode=pl.Buffered(3))
    else:
        w_spec = pl.BlockSpec((D, block_c), lambda b, c: (0, c))

    inputs = [emb_p, w_p, lab_p]
    in_specs = [
        pl.BlockSpec((block_b, D), lambda b, c: (b, 0)),
        w_spec,
        pl.BlockSpec((block_b, 1), lambda b, c: (b, 0)),
    ]
    if mask_padding:
        class_bias = jnp.where(jnp.arange(c_pad) < C, 0.0, _NEG_INF)
        class_bias = class_bias.astype(jnp.float32).reshape(1, c_pad)
        inputs.append(class_bias)
        in_specs.append(pl.BlockSpec((1, block_c), lambda b, c: (0, c)))

    kernel = functools.partial(
        _softmax_loss_kernel,
        batch=B, block_b=block_b, block_c=block_c,
        mask_padding=mask_padding, mask_rows=mask_rows)

    cost = pl.CostEstimate(
        flops=2 * b_pad * D * c_pad,
        transcendentals=b_pad * c_pad,
        bytes_accessed=(emb_p.size * emb_p.dtype.itemsize
                        + n_b * w_p.size * w_p.dtype.itemsize      # W streamed n_b times
                        + lab_p.size * 4 + n_b * 4))

    partial_sums = pl.pallas_call(
        kernel,
        out_shape=jax.ShapeDtypeStruct((n_b, 1), jnp.float32),
        grid_spec=pltpu.PrefetchScalarGridSpec(
            num_scalar_prefetch=0,
            grid=(n_b, n_c),                          # reduction (class) axis last
            in_specs=in_specs,
            out_specs=pl.BlockSpec((1, 1), lambda b, c: (b, 0),
                                   memory_space=pltpu.MemorySpace.SMEM),
            scratch_shapes=[
                pltpu.VMEM((block_b, 1), jnp.float32),   # running max
                pltpu.VMEM((block_b, 1), jnp.float32),   # running sum
                pltpu.VMEM((block_b, 1), jnp.float32),   # target-logit acc
            ],
        ),
        compiler_params=pltpu.CompilerParams(
            dimension_semantics=("parallel", "arbitrary"),
            vmem_limit_bytes=lim["vmem_limit"]),
        cost_estimate=cost,
    )(*inputs)

    return jnp.sum(partial_sums) / B


def _reference_loss(embedding, W, labels):
    logits = embedding.astype(jnp.float32) @ W.astype(jnp.float32)
    lse = jax.scipy.special.logsumexp(logits, axis=-1)
    tgt = jnp.take_along_axis(logits, labels[:, None], axis=-1)[:, 0]
    return jnp.mean(lse - tgt)


if __name__ == "__main__":
    # Small shapes consistent with the module: batch=8, feature_dim=32, num_class=16.
    B, D, C = 8, 32, 16
    key = jax.random.PRNGKey(0)
    k_emb, k_w, k_lab = jax.random.split(key, 3)

    embedding = jax.random.normal(k_emb, (B, D), dtype=jnp.float32)
    # Deterministic xavier_normal_ init (gain=1): std = sqrt(2 / (fan_in + fan_out)).
    xavier_std = (2.0 / (D + C)) ** 0.5
    W = jax.random.normal(k_w, (D, C), dtype=jnp.float32) * xavier_std
    labels = jax.random.randint(k_lab, (B,), 0, C, dtype=jnp.int32)

    ref = _reference_loss(embedding, W, labels)

    # f32 path: must match the reference tightly.
    loss = my_softmax_loss(embedding, W, labels)
    jax.block_until_ready(loss)
    assert jnp.allclose(loss, ref, atol=1e-5, rtol=1e-5), (loss, ref)

    # bf16-streamed perf path: operands in bf16, accumulation/LSE in f32.
    loss_bf16 = my_softmax_loss(embedding, W, labels, matmul_dtype=jnp.bfloat16)
    jax.block_until_ready(loss_bf16)
    assert jnp.allclose(loss_bf16, ref, atol=5e-2, rtol=5e-2), (loss_bf16, ref)

    print("KERNEL_OK")
</pallas_src>

<mosaic_0001>
module attributes {stable_mosaic.version = 11 : i64} {
  func.func @_softmax_loss_kernel(%arg0: i32, %arg1: i32, %arg2: memref<8x32xf32, #tpu.memory_space<vmem>>, %arg3: memref<32x128xf32, #tpu.memory_space<vmem>>, %arg4: memref<8x1xi32, #tpu.memory_space<vmem>>, %arg5: memref<1x128xf32, #tpu.memory_space<vmem>>, %arg6: memref<1x1xf32, #tpu.memory_space<smem>>, %arg7: memref<8x1xf32, #tpu.memory_space<vmem>>, %arg8: memref<8x1xf32, #tpu.memory_space<vmem>>, %arg9: memref<8x1xf32, #tpu.memory_space<vmem>>) attributes {dimension_semantics = [#tpu.dimension_semantics<parallel>, #tpu.dimension_semantics<arbitrary>], iteration_bounds = array<i64: 1, 1>, scalar_prefetch = 0 : i64, scratch_operands = 3 : i64, tpu.core_type = #tpu.core_type<tc>, window_params = [{transform_indices = @transform_0, window_bounds = array<i64: 8, 32>}, {transform_indices = @transform_1, window_bounds = array<i64: 32, 128>}, {transform_indices = @transform_2, window_bounds = array<i64: 8, 1>}, {transform_indices = @transform_3, window_bounds = array<i64: 1, 128>}, {transform_indices = @transform_4, window_bounds = array<i64: 1, 1>}]} {
    %c0_i32 = arith.constant 0 : i32
    %0 = arith.cmpi eq, %arg1, %c0_i32 : i32
    %1 = arith.extui %0 : i1 to i32
    %c0_i32_0 = arith.constant 0 : i32
    %2 = arith.cmpi ne, %1, %c0_i32_0 : i32
    scf.if %2 {
      %cst_26 = arith.constant -1.000000e+30 : f32
      %42 = vector.broadcast %cst_26 : f32 to vector<8x1xf32>
      %c0_27 = arith.constant 0 : index
      %c0_28 = arith.constant 0 : index
      %43 = vector.load %arg7[%c0_27, %c0_28] : memref<8x1xf32, #tpu.memory_space<vmem>>, vector<8x1xf32>
      tpu.vector_store %arg7[%c0_27, %c0_28], %42 {strides = array<i32>} : memref<8x1xf32, #tpu.memory_space<vmem>>, vector<8x1xf32>,
      %cst_29 = arith.constant 0.000000e+00 : f32
      %44 = vector.broadcast %cst_29 : f32 to vector<8x1xf32>
      %c0_30 = arith.constant 0 : index
      %c0_31 = arith.constant 0 : index
      %45 = vector.load %arg8[%c0_30, %c0_31] : memref<8x1xf32, #tpu.memory_space<vmem>>, vector<8x1xf32>
      tpu.vector_store %arg8[%c0_30, %c0_31], %44 {strides = array<i32>} : memref<8x1xf32, #tpu.memory_space<vmem>>, vector<8x1xf32>,
      %cst_32 = arith.constant 0.000000e+00 : f32
      %46 = vector.broadcast %cst_32 : f32 to vector<8x1xf32>
      %c0_33 = arith.constant 0 : index
      %c0_34 = arith.constant 0 : index
      %47 = vector.load %arg9[%c0_33, %c0_34] : memref<8x1xf32, #tpu.memory_space<vmem>>, vector<8x1xf32>
      tpu.vector_store %arg9[%c0_33, %c0_34], %46 {strides = array<i32>} : memref<8x1xf32, #tpu.memory_space<vmem>>, vector<8x1xf32>,
    } else {
    }
    %c0 = arith.constant 0 : index
    %c0_1 = arith.constant 0 : index
    %3 = vector.load %arg2[%c0, %c0_1] : memref<8x32xf32, #tpu.memory_space<vmem>>, vector<8x32xf32>
    %c0_2 = arith.constant 0 : index
    %c0_3 = arith.constant 0 : index
    %4 = vector.load %arg3[%c0_2, %c0_3] : memref<32x128xf32, #tpu.memory_space<vmem>>, vector<32x128xf32>
    %cst = arith.constant dense<0.000000e+00> : vector<8x128xf32>
    %5 = tpu.matmul %3, %4, %cst {dimension_numbers = #tpu.dot_dimension_numbers<[1], [0], [0], [1], [0, 0, 1, 1], [], []>} : vector<8x32xf32>, vector<32x128xf32>, vector<8x128xf32> -> vector<8x128xf32>
    %c0_4 = arith.constant 0 : index
    %c0_5 = arith.constant 0 : index
    %6 = vector.load %arg5[%c0_4, %c0_5] : memref<1x128xf32, #tpu.memory_space<vmem>>, vector<1x128xf32>
    %7 = vector.broadcast %6 : vector<1x128xf32> to vector<8x128xf32>
    %8 = arith.addf %5, %7 : vector<8x128xf32>
    %c0_6 = arith.constant 0 : index
    %c0_7 = arith.constant 0 : index
    %9 = vector.load %arg7[%c0_6, %c0_7] : memref<8x1xf32, #tpu.memory_space<vmem>>, vector<8x1xf32>
    %cst_8 = arith.constant dense<0xFF800000> : vector<8xf32>
    %10 = vector.multi_reduction <maximumf>, %8, %cst_8 [1] : vector<8x128xf32> to vector<8xf32>
    %11 = vector.shape_cast %10 : vector<8xf32> to vector<8x1xf32>
    %12 = arith.maximumf %9, %11 : vector<8x1xf32>
    %13 = arith.subf %9, %12 : vector<8x1xf32>
    %14 = math.exp %13 : vector<8x1xf32>
    %c0_9 = arith.constant 0 : index
    %c0_10 = arith.constant 0 : index
    %15 = vector.load %arg8[%c0_9, %c0_10] : memref<8x1xf32, #tpu.memory_space<vmem>>, vector<8x1xf32>
    %16 = arith.mulf %14, %15 : vector<8x1xf32>
    %17 = vector.broadcast %12 : vector<8x1xf32> to vector<8x128xf32>
    %18 = arith.subf %8, %17 : vector<8x128xf32>
    %19 = math.exp %18 : vector<8x128xf32>
    %cst_11 = arith.constant dense<0.000000e+00> : vector<8xf32>
    %20 = vector.multi_reduction <add>, %19, %cst_11 [1] : vector<8x128xf32> to vector<8xf32>
    %21 = vector.shape_cast %20 : vector<8xf32> to vector<8x1xf32>
    %22 = arith.addf %16, %21 : vector<8x1xf32>
    %c0_12 = arith.constant 0 : index
    %c0_13 = arith.constant 0 : index
    %23 = vector.load %arg8[%c0_12, %c0_13] : memref<8x1xf32, #tpu.memory_space<vmem>>, vector<8x1xf32>
    tpu.vector_store %arg8[%c0_12, %c0_13], %22 {strides = array<i32>} : memref<8x1xf32, #tpu.memory_space<vmem>>, vector<8x1xf32>,
    %c0_14 = arith.constant 0 : index
    %c0_15 = arith.constant 0 : index
    %24 = vector.load %arg7[%c0_14, %c0_15] : memref<8x1xf32, #tpu.memory_space<vmem>>, vector<8x1xf32>
    tpu.vector_store %arg7[%c0_14, %c0_15], %12 {strides = array<i32>} : memref<8x1xf32, #tpu.memory_space<vmem>>, vector<8x1xf32>,
    %c128_i32 = arith.constant 128 : i32
    %25 = arith.muli %arg1, %c128_i32 : i32
    %26 = tpu.iota {dimensions = array<i32: 1>} : vector<8x128xi32>
    %27 = vector.broadcast %25 : i32 to vector<8x128xi32>
    %28 = arith.addi %27, %26 : vector<8x128xi32>
    %c0_16 = arith.constant 0 : index
    %c0_17 = arith.constant 0 : index
    %29 = vector.load %arg4[%c0_16, %c0_17] : memref<8x1xi32, #tpu.memory_space<vmem>>, vector<8x1xi32>
    %c0_18 = arith.constant 0 : index
    %c0_19 = arith.constant 0 : index
    %30 = vector.load %arg9[%c0_18, %c0_19] : memref<8x1xf32, #tpu.memory_space<vmem>>, vector<8x1xf32>
    %31 = vector.broadcast %29 : vector<8x1xi32> to vector<8x128xi32>
    %32 = arith.cmpi eq, %28, %31 : vector<8x128xi32>
    %cst_20 = arith.constant 0.000000e+00 : f32
    %33 = vector.broadcast %cst_20 : f32 to vector<8x128xf32>
    %34 = arith.select %32, %8, %33 : vector<8x128xi1>, vector<8x128xf32>
    %cst_21 = arith.constant dense<0.000000e+00> : vector<8xf32>
    %35 = vector.multi_reduction <add>, %34, %cst_21 [1] : vector<8x128xf32> to vector<8xf32>
    %36 = vector.shape_cast %35 : vector<8xf32> to vector<8x1xf32>
    %37 = arith.addf %30, %36 : vector<8x1xf32>
    %c0_22 = arith.constant 0 : index
    %c0_23 = arith.constant 0 : index
    %38 = vector.load %arg9[%c0_22, %c0_23] : memref<8x1xf32, #tpu.memory_space<vmem>>, vector<8x1xf32>
    tpu.vector_store %arg9[%c0_22, %c0_23], %37 {strides = array<i32>} : memref<8x1xf32, #tpu.memory_space<vmem>>, vector<8x1xf32>,
    %c0_i32_24 = arith.constant 0 : i32
    %39 = arith.cmpi eq, %arg1, %c0_i32_24 : i32
    %40 = arith.extui %39 : i1 to i32
    %c0_i32_25 = arith.constant 0 : i32
    %41 = arith.cmpi ne, %40, %c0_i32_25 : i32
    scf.if %41 {
      %c0_26 = arith.constant 0 : index
      %c0_27 = arith.constant 0 : index
      %42 = vector.load %arg7[%c0_26, %c0_27] : memref<8x1xf32, #tpu.memory_space<vmem>>, vector<8x1xf32>
      %c0_28 = arith.constant 0 : index
      %c0_29 = arith.constant 0 : index
      %43 = vector.load %arg8[%c0_28, %c0_29] : memref<8x1xf32, #tpu.memory_space<vmem>>, vector<8x1xf32>
      %44 = math.log %43 : vector<8x1xf32>
      %45 = arith.addf %42, %44 : vector<8x1xf32>
      %c0_30 = arith.constant 0 : index
      %c0_31 = arith.constant 0 : index
      %46 = vector.load %arg9[%c0_30, %c0_31] : memref<8x1xf32, #tpu.memory_space<vmem>>, vector<8x1xf32>
      %47 = arith.subf %45, %46 : vector<8x1xf32>
      %48 = vector.shape_cast %47 : vector<8x1xf32> to vector<1x8x1xf32>
      %cst_32 = arith.constant dense<0.000000e+00> : vector<1xf32>
      %49 = vector.multi_reduction <add>, %48, %cst_32 [1, 2] : vector<1x8x1xf32> to vector<1xf32>
      %50 = vector.shape_cast %49 : vector<1xf32> to vector<1x1x1xf32>
      %51 = vector.extract %50[0, 0, 0] : f32 from vector<1x1x1xf32>
      %c0_33 = arith.constant 0 : index
      %c0_34 = arith.constant 0 : index
      %52 = memref.load %arg6[%c0_33, %c0_34] : memref<1x1xf32, #tpu.memory_space<smem>>
      memref.store %51, %arg6[%c0_33, %c0_34] : memref<1x1xf32, #tpu.memory_space<smem>>
    } else {
    }
    return
  }
  func.func @transform_0(%arg0: i32, %arg1: i32) -> (i32, i32) {
    %c0_i32 = arith.constant 0 : i32
    %c0_i32_0 = arith.constant 0 : i32
    return %arg0, %c0_i32 : i32, i32
  }
  func.func @transform_1(%arg0: i32, %arg1: i32) -> (i32, i32) {
    %c0_i32 = arith.constant 0 : i32
    %c0_i32_0 = arith.constant 0 : i32
    return %c0_i32, %arg1 : i32, i32
  }
  func.func @transform_2(%arg0: i32, %arg1: i32) -> (i32, i32) {
    %c0_i32 = arith.constant 0 : i32
    %c0_i32_0 = arith.constant 0 : i32
    return %arg0, %c0_i32 : i32, i32
  }
  func.func @transform_3(%arg0: i32, %arg1: i32) -> (i32, i32) {
    %c0_i32 = arith.constant 0 : i32
    %c0_i32_0 = arith.constant 0 : i32
    return %c0_i32, %arg1 : i32, i32
  }
  func.func @transform_4(%arg0: i32, %arg1: i32) -> (i32, i32) {
    %c0_i32 = arith.constant 0 : i32
    %c0_i32_0 = arith.constant 0 : i32
    return %arg0, %c0_i32 : i32, i32
  }
}

</mosaic_0001>

<llo_original>
// kernel: tpu_custom_call.1
$region0: #{tpu_custom_call.1}
  #allocation0 [shape = 'u32[]', space=smem, size = 0x4, offset = 0x4, fixed_abs, tag = 'smem constant byte address 0x4 - core index']
  #allocation1 [shape = 'u32[144,128]{1,0:T(1,128)}', space=vmem, size = 0x12000, scoped, tag = 'internal scratch']
  #allocation2 [shape = 'f32[8,1]{1,0:T(8,128)}', space=vmem, size = 0x1000, scoped, tag = 'scratch operand']
  #allocation3 [shape = 'f32[8,1]{1,0:T(8,128)}', space=vmem, size = 0x1000, scoped, tag = 'scratch operand']
  #allocation4 [shape = 'f32[8,1]{1,0:T(8,128)}', space=vmem, size = 0x1000, scoped, tag = 'scratch operand']
  %s0 = inlined_call_operand.vmem [shape: f32[8,32], index: 0, kind: input, shape index: {}]
  %s1 = inlined_call_operand.hbm [shape: f32[32,128], index: 1, kind: input, shape index: {}]
  %s2 = inlined_call_operand.vmem [shape: s32[8,1], index: 2, kind: input, shape index: {}]
  %s3 = inlined_call_operand.vmem [shape: f32[1,128], index: 3, kind: input, shape index: {}]
  %s4 = inlined_call_operand.hbm [shape: f32[1,1], index: 4, kind: output, shape index: {}]
  %s5 = sld [smem:[#allocation0]]
  $region38: #{tpu_custom_call.1} parent=0
    _
  %s7 = ssub.s32 1, %s5
  %s8 = scalar_select 0, %s7, %s5
  $region1: #{tpu_custom_call.1} parent=0
    #allocation5 [shape = 'u8[16384]{0}', space=vmem, size = 0x4000, scoped, tag = 'input window, operand 1, single buffered']
    #allocation6 [shape = 's32[1]{0}', space=sflag, size = 0x4, scoped, tag = 'scoped memory for tpu_custom_call.1']
    #allocation7 [shape = 's32[1]{0}', space=sflag, size = 0x4, scoped, tag = 'scoped memory for tpu_custom_call.1']
    #allocation8 [shape = 'u8[512]{0}', space=smem, size = 0x200, scoped, tag = 'output window, operand 0, single buffered']
    %9 = vsyncpa [#allocation6], 0
    %10 = vsyncpa [#allocation7], 0
    // Predicated region
    $region2: #{tpu_custom_call.1} parent=1 // pred_check
      _
    $region3: #{tpu_custom_call.1} parent=1 // pred_check_branch
      %12 = sbr.rel (0) target = $region5
    $region4: #{tpu_custom_call.1} parent=1 // pred_region
      _
    $region5: #{tpu_custom_call.1} parent=1 // pred_fallthru
      _
    // Predicated region
    $region6: #{tpu_custom_call.1} parent=1 // pred_check
      _
    $region7: #{tpu_custom_call.1} parent=1 // pred_check_branch
      %14 = sbr.rel (0) target = $region9
    $region8: #{tpu_custom_call.1} parent=1 // pred_region
      %s16 = ssub.s32 512, 512
      %17 = vsyncadd [#allocation6], %s16
      %s18 = sshll.u32 [#allocation5], 4
      %s19 = int_to_ptr.vmem [resolvable:$true] %s18
      %24 = dma.hbm_to_vmem [thread:$0]  %s1, 512, %s19, [#allocation6], 128, 128, 8
    $region9: #{tpu_custom_call.1} parent=1 // pred_fallthru
      _
    // Predicated region
    $region10: #{tpu_custom_call.1} parent=1 // pred_check
      _
    $region11: #{tpu_custom_call.1} parent=1 // pred_check_branch
      %26 = sbr.rel (0) target = $region13
    $region12: #{tpu_custom_call.1} parent=1 // pred_region
      _
    $region13: #{tpu_custom_call.1} parent=1 // pred_fallthru
      _
    // Predicated region
    $region14: #{tpu_custom_call.1} parent=1 // pred_check
      _
    $region15: #{tpu_custom_call.1} parent=1 // pred_check_branch
      %28 = sbr.rel (0) target = $region17
    $region16: #{tpu_custom_call.1} parent=1 // pred_region
      _
    $region17: #{tpu_custom_call.1} parent=1 // pred_fallthru
      _
    // Predicated region
    $region18: #{tpu_custom_call.1} parent=1 // pred_check
      _
    $region19: #{tpu_custom_call.1} parent=1 // pred_check_branch
      %30 = sbr.rel (0) target = $region21
    $region20: #{tpu_custom_call.1} parent=1 // pred_region
      %31 = dma.done [#allocation6], 512
    $region21: #{tpu_custom_call.1} parent=1 // pred_fallthru
      _
    %p32 = scmp.eq.s32.totalorder 0, 0
    // Predicated region
    $region22: #{tpu_custom_call.1} parent=1 // pred_check
      %p33 = pneg %p32
    $region23: #{tpu_custom_call.1} parent=1 // pred_check_branch
      %35 = sbr.rel (%p33) target = $region25
    $region24: #{tpu_custom_call.1} parent=1 // pred_region
      %vm36 = vcmask 7168
      %37 = vst.msk [vmem:[#allocation2] sm:$0xff] %vm36, -1e+30
      %38 = vst.msk [vmem:[#allocation3] sm:$0xff] %vm36, 0.0
      %39 = vst.msk [vmem:[#allocation4] sm:$0xff] %vm36, 0.0
    $region25: #{tpu_custom_call.1} parent=1 // pred_fallthru
      _
    %v40 = vld [vmem:[%s0] sm:$0xff]
    %v41 = vld [vmem:[#allocation5] sm:$0xff]
    %v42 = vld [vmem:[#allocation5 + $0x8] sm:$0xff]
    %v43 = vld [vmem:[#allocation5 + $0x10] sm:$0xff]
    %v44 = vld [vmem:[#allocation5 + $0x18] sm:$0xff]
    %v45 = vld [vmem:[%s3] sm:$0x1]
    %v47 = vlaneseq
    %v48 = vshrl.u32 %v47, 7
    %v49 = vsub.s32 0, %v48
    %v50 = vrot.slane %v45, %v49
    %vm52 = vcmask 261120
    %v54 = vsel %vm52, %v40, 0
    %56 = vmatprep.subr.mxu0 0.0
    %57 = vmatpush1.msra.mxu0 0.0
    %58 = vmatprep.subr.mxu0 0.0
    %59 = vmatpush1.msra.mxu0 0.0
    %60 = vmatprep.subr.mxu0 0.0
    %61 = vmatpush1.msra.mxu0 0.0
    %62 = vmatprep.subr.mxu0 0.0
    %63 = vmatpush1.msra.mxu0 0.0
    %64 = vmatprep.subr.mxu0 0.0
    %65 = vmatpush1.msra.mxu0 0.0
    %66 = vmatprep.subr.mxu0 0.0
    %67 = vmatpush1.msra.mxu0 0.0
    %68 = vmatprep.subr.mxu0 0.0
    %69 = vmatpush1.msra.mxu0 0.0
    %70 = vmatprep.subr.mxu0 0.0
    %71 = vmatpush1.msra.mxu0 0.0
    %72 = vmatprep.subr.mxu0 0.0
    %73 = vmatpush1.msra.mxu0 0.0
    %74 = vmatprep.subr.mxu0 0.0
    %75 = vmatpush1.msra.mxu0 0.0
    %76 = vmatprep.subr.mxu0 0.0
    %77 = vmatpush1.msra.mxu0 0.0
    %78 = vmatprep.subr.mxu0 0.0
    %79 = vmatpush1.msra.mxu0 0.0
    %80 = vmatprep.subr.mxu0 0.0
    %81 = vmatpush1.msra.mxu0 %v44
    %82 = vmatprep.subr.mxu0 0.0
    %83 = vmatpush1.msra.mxu0 %v43
    %84 = vmatprep.subr.mxu0 0.0
    %85 = vmatpush1.msra.mxu0 %v42
    %86 = vmatprep.subr.mxu0 0.0
    %87 = vmatpush1.msra.mxu0 %v41
    %88 = vmatprep.subr.mxu0 0.0
    %89 = vmatpush2.msra.mxu0 0.0
    %90 = vmatprep.subr.mxu0 0.0
    %91 = vmatpush2.msra.mxu0 0.0
    %92 = vmatprep.subr.mxu0 0.0
    %93 = vmatpush2.msra.mxu0 0.0
    %94 = vmatprep.subr.mxu0 0.0
    %95 = vmatpush2.msra.mxu0 0.0
    %96 = vmatprep.subr.mxu0 0.0
    %97 = vmatpush2.msra.mxu0 0.0
    %98 = vmatprep.subr.mxu0 0.0
    %99 = vmatpush2.msra.mxu0 0.0
    %100 = vmatprep.subr.mxu0 0.0
    %101 = vmatpush2.msra.mxu0 0.0
    %102 = vmatprep.subr.mxu0 0.0
    %103 = vmatpush2.msra.mxu0 0.0
    %104 = vmatprep.subr.mxu0 0.0
    %105 = vmatpush2.msra.mxu0 0.0
    %106 = vmatprep.subr.mxu0 0.0
    %107 = vmatpush2.msra.mxu0 0.0
    %108 = vmatprep.subr.mxu0 0.0
    %109 = vmatpush2.msra.mxu0 0.0
    %110 = vmatprep.subr.mxu0 0.0
    %111 = vmatpush2.msra.mxu0 0.0
    %112 = vmatprep.subr.mxu0 0.0
    %113 = vmatpush2.msra.mxu0 0.0
    %114 = vmatprep.subr.mxu0 0.0
    %115 = vmatpush2.msra.mxu0 0.0
    %116 = vmatprep.subr.mxu0 0.0
    %117 = vmatpush2.msra.mxu0 0.0
    %118 = vmatprep.subr.mxu0 0.0
    %119 = vmatpush2.msra.mxu0 0.0
    %120 = vmatprep.mubr.f32.mxu0 0.0
    %121 = vmatmul.mubr.f32.gmra.mxu0 %v54
    %v122 = vpop.f32.mrf.mxu0
    %v123 = vadd.f32 %v50, %v122
    %v124 = vpop.f32.mrf.mxu0
    %125 = vdwg.mxu0
    %v126 = vld [vmem:[#allocation2] sm:$0xff]
    %127 = vmax.xlane.f32.xlu0 %v123
    %v128 = vpop.xlane.xlu0 %127
    %v129 = vmax.f32 %v126, %v128
    %v130 = vsub.f32 %v126, %v129
    %v131 = vmul.f32 %v130, 1.442695
    %v132 = vpow.pop %v131
    %v133 = vld [vmem:[#allocation3] sm:$0xff]
    %v134 = vmul.f32 %v132, %v133
    %136 = vset.pattern.permute.xlu0 0
    %137 = vperm.xlu0 %136, %v129
    %v138 = vpop.permute.xlu0 %137
    %v140 = vsub.f32 %v123, %v138
    %v141 = vmul.f32 %v140, 1.442695
    %v142 = vpow.pop %v141
    %143 = vadd.xlane.f32.xlu0 %v142
    %v144 = vpop.xlane.xlu0 %143
    %v145 = vadd.f32 %v134, %v144
    %vm146 = vcmask 7168
    %147 = vst.msk [vmem:[#allocation3] sm:$0xff] %vm146, %v145
    %148 = vst.msk [vmem:[#allocation2] sm:$0xff] %vm146, %v129
    %s149 = smul.u32 0, 128
    %v150 = vlaneseq
    %v151 = vand.u32 %v150, 127
    %v152 = vstv %s149
    %v153 = vadd.s32 %v152, %v151
    %v154 = vld [vmem:[%s2] sm:$0xff]
    %v155 = vld [vmem:[#allocation4] sm:$0xff]
    %156 = vset.pattern.permute.xlu0 0
    %157 = vperm.xlu0 %156, %v154
    %v158 = vpop.permute.xlu0 %157
    %vm159 = vcmp.eq.s32.totalorder %v153, %v158
    %v160 = vsel %vm159, %v123, 0.0
    %161 = vadd.xlane.f32.xlu0 %v160
    %v162 = vpop.xlane.xlu0 %161
    %v163 = vadd.f32 %v155, %v162
    %164 = vst.msk [vmem:[#allocation4] sm:$0xff] %vm146, %v163
    // Predicated region
    $region26: #{tpu_custom_call.1} parent=1 // pred_check
      %p165 = pneg %p32
    $region27: #{tpu_custom_call.1} parent=1 // pred_check_branch
      %167 = sbr.rel (%p165) target = $region29
    $region28: #{tpu_custom_call.1} parent=1 // pred_region
      %v168 = vld [vmem:[#allocation2] sm:$0xff]
      %v169 = vld [vmem:[#allocation3] sm:$0xff]
      %v170 = vlog2.pop %v169
      %v171 = vmul.f32 %v170, 0.6931472
      %v172 = vadd.f32 %v168, %v171
      %v173 = vld [vmem:[#allocation4] sm:$0xff]
      %v174 = vsub.f32 %v172, %v173
      %v175 = vsel %vm146, %v174, 0.0
      %176 = vadd.xlane.f32.xlu0 %v175
      %v177 = vpop.xlane.xlu0 %176
      %v178 = vrot.slane %v177, 4
      %v179 = vadd.f32 %v177, %v178
      %v180 = vrot.slane %v179, 2
      %v181 = vadd.f32 %v179, %v180
      %v182 = vrot.slane %v181, 1
      %v183 = vadd.f32 %v181, %v182
      %s184 = vtos %v183
      %s185 = scalar_lea.smem [#allocation8], 0
      %186 = sst [smem:[%s185]] %s184
    $region29: #{tpu_custom_call.1} parent=1 // pred_fallthru
      _
    // Predicated region
    $region30: #{tpu_custom_call.1} parent=1 // pred_check
      _
    $region31: #{tpu_custom_call.1} parent=1 // pred_check_branch
      %188 = sbr.rel (0) target = $region33
    $region32: #{tpu_custom_call.1} parent=1 // pred_region
      %s190 = ssub.s32 16, 16
      %191 = vsyncadd [#allocation7], %s190
      %194 = dma.smem_to_hbm [#allocation8], 16, %s4, [#allocation7]
    $region33: #{tpu_custom_call.1} parent=1 // pred_fallthru
      _
    // Predicated region
    $region34: #{tpu_custom_call.1} parent=1 // pred_check
      _
    $region35: #{tpu_custom_call.1} parent=1 // pred_check_branch
      %196 = sbr.rel (0) target = $region37
    $region36: #{tpu_custom_call.1} parent=1 // pred_region
      %197 = dma.done [#allocation7], 16
    $region37: #{tpu_custom_call.1} parent=1 // pred_fallthru
      _
    %198 = sfence
    %199 = vsyncpa [#allocation6], 1
    %200 = vsyncpa [#allocation7], 1

</llo_original>
